<compile_context>
chip_gen: v5e
topology: v5e:2x2
jax: 0.10.0
libtpu: 0.0.40
codegen_flags: <defaults>
</compile_context>

<pallas_src>
import functools
import math

import jax
import jax.numpy as jnp
from jax.experimental import pallas as pl
from jax.experimental.pallas import tpu as pltpu

LANE = 128            # hidden (24) padded to one lane-register width
SUBLANE = 8
IN_FEATURES = 2
HIDDEN = 24
MAX_TILE_B = 2048     # batch rows per grid step (double-buffered working set ~8 MiB f32)
VMEM_LIMIT_BYTES = 32 * 1024 * 1024


def _round_up(n, m):
    return ((n + m - 1) // m) * m


def _pad2(a, rows, cols, dtype=None):
    a = jnp.asarray(a)
    if dtype is not None:
        a = a.astype(dtype)
    r, c = a.shape
    return jnp.pad(a, ((0, rows - r), (0, cols - c)))


def _use_bf16_default():
    # Heuristic: bf16 VPU/EUP/MXU paths are native on v6e / v7x; keep f32 elsewhere.
    # (device_kind substring match is imperfect but fails safe to the f32 path.)
    try:
        kind = jax.devices()[0].device_kind.lower()
    except Exception:
        return False
    return any(tag in kind for tag in ("v6", "v7", "7x"))


def init_params(key, actions):
    """Deterministic init matching nn.Linear default: U(-1/sqrt(fan_in), 1/sqrt(fan_in))."""
    ks = jax.random.split(key, 6)

    def linear(kw, kb, fan_in, fan_out):
        bound = 1.0 / math.sqrt(fan_in)
        w = jax.random.uniform(kw, (fan_in, fan_out), jnp.float32, -bound, bound)
        b = jax.random.uniform(kb, (fan_out,), jnp.float32, -bound, bound)
        return w, b

    w1, b1 = linear(ks[0], ks[1], IN_FEATURES, HIDDEN)
    w2, b2 = linear(ks[2], ks[3], HIDDEN, HIDDEN)
    w3, b3 = linear(ks[4], ks[5], HIDDEN, actions)
    return {"w1": w1, "b1": b1, "w2": w2, "b2": b2, "w3": w3, "b3": b3}


def prepare_params(params, use_bf16=False):
    """Pad/cast weights ONCE (hoisted out of the per-forward path)."""
    h_dtype = jnp.bfloat16 if use_bf16 else jnp.float32
    return {
        # first layer keeps its true K=2 row dim (full-array block): no 64x input inflation
        "w1": _pad2(params["w1"], IN_FEATURES, LANE, jnp.float32),
        "b1": _pad2(params["b1"][None, :], 1, LANE, jnp.float32),
        "w2": _pad2(params["w2"], LANE, LANE, h_dtype),
        "b2": _pad2(params["b2"][None, :], 1, LANE, jnp.float32),
        "w3": _pad2(params["w3"], LANE, LANE, h_dtype),
        "b3": _pad2(params["b3"][None, :], 1, LANE, jnp.float32),
    }


def critic_mlp_kernel(x_ref, w1_ref, b1_ref, w2_ref, b2_ref, w3_ref, b3_ref,
                      o_ref, *, use_bf16):
    # Zero padding keeps the math exact: zero weight rows/cols contribute nothing and
    # tanh(0)=0; padded batch rows are sliced off in the wrapper.
    h_dtype = jnp.bfloat16 if use_bf16 else jnp.float32

    x = x_ref[...]                         # (tile_b, 2) f32
    w1 = w1_ref[...]                       # (2, 128) f32
    # Layer 1 has K=2: two VPU broadcast-FMAs avoid an MXU push with a badly-shaped
    # (tile_b,2)@(2,128) operand pair.
    z1 = (x[:, 0:1] * w1[0:1, :] + x[:, 1:2] * w1[1:2, :]) + b1_ref[...]
    # tanh on the f32 pre-activation (EUP); only the matmul operands are cast down, so
    # numerics stay near-f32 while the MXU still takes the bf16 path on v6e/v7x.
    h1 = jnp.tanh(z1).astype(h_dtype)
    z2 = jnp.dot(h1, w2_ref[...], preferred_element_type=jnp.float32) + b2_ref[...]
    h2 = jnp.tanh(z2).astype(h_dtype)
    z3 = jnp.dot(h2, w3_ref[...], preferred_element_type=jnp.float32) + b3_ref[...]
    # Narrow store: only the `actions` useful lanes hit HBM (~actions*4 B/row instead of
    # 512 B/row of padded slab).
    o_ref[...] = z3[:, : o_ref.shape[1]].astype(o_ref.dtype)


@functools.partial(jax.jit, static_argnames=("actions", "use_bf16"))
def critic_forward(x, padded, actions, use_bf16=False):
    """x: (B, 2) float32.  padded: output of prepare_params.  Returns (B, actions)."""
    B = x.shape[0]
    Bp8 = _round_up(max(B, 1), SUBLANE)
    # Cap tile_b at ceil(Bp/2) so there are >= 2 grid steps whenever the batch allows it:
    # v7x's 2 TensorCores both get work from the "parallel" axis (one extra ~0.35us step
    # on single-TC v5e/v6e is noise).
    tile_b = min(MAX_TILE_B, max(SUBLANE, _round_up((Bp8 + 1) // 2, SUBLANE)))
    Bp = _round_up(Bp8, tile_b)
    xp = _pad2(x.astype(jnp.float32), Bp, IN_FEATURES)   # only batch-dim padding per call
    grid = (Bp // tile_b,)

    weight_bytes = sum(int(v.size) * v.dtype.itemsize for v in padded.values())
    cost = pl.CostEstimate(
        flops=2 * Bp * (IN_FEATURES * LANE + LANE * LANE + LANE * LANE),
        transcendentals=2 * Bp * LANE,
        bytes_accessed=Bp * IN_FEATURES * 4 + Bp * actions * 4 + weight_bytes,
    )

    out_p = pl.pallas_call(
        functools.partial(critic_mlp_kernel, use_bf16=use_bf16),
        out_shape=jax.ShapeDtypeStruct((Bp, actions), jnp.float32),
        grid=grid,
        in_specs=[
            pl.BlockSpec((tile_b, IN_FEATURES), lambda i: (i, 0)),  # x streams per tile
            pl.BlockSpec((IN_FEATURES, LANE), lambda i: (0, 0)),    # weights stay resident
            pl.BlockSpec((1, LANE), lambda i: (0, 0)),
            pl.BlockSpec((LANE, LANE), lambda i: (0, 0)),
            pl.BlockSpec((1, LANE), lambda i: (0, 0)),
            pl.BlockSpec((LANE, LANE), lambda i: (0, 0)),
            pl.BlockSpec((1, LANE), lambda i: (0, 0)),
        ],
        out_specs=pl.BlockSpec((tile_b, actions), lambda i: (i, 0)),
        compiler_params=pltpu.CompilerParams(
            dimension_semantics=("parallel",),
            vmem_limit_bytes=VMEM_LIMIT_BYTES,
        ),
        cost_estimate=cost,
    )(xp, padded["w1"], padded["b1"], padded["w2"], padded["b2"],
      padded["w3"], padded["b3"])

    # Row de-pad only: the kernel already emits the narrow (Bp, actions) result, so this
    # copies a tiny array (XLA cannot fuse into a Pallas custom call, hence the kernel
    # itself was changed to never write the padded 128-lane slab).
    return out_p[:B]


def critic_reference(x, p):
    h1 = jnp.tanh(x @ p["w1"] + p["b1"])
    h2 = jnp.tanh(h1 @ p["w2"] + p["b2"])
    return h2 @ p["w3"] + p["b3"]


if __name__ == "__main__":
    actions = 4
    key = jax.random.PRNGKey(0)
    k_x, k_p, k_x2 = jax.random.split(key, 3)

    params = init_params(k_p, actions)
    use_bf16 = _use_bf16_default()
    padded = prepare_params(params, use_bf16=use_bf16)
    # bf16 is only used for matmul operands/weights (tanh inputs stay f32), so the
    # tolerance is much tighter than a full-bf16 pipeline would need.
    tol = 5e-2 if use_bf16 else 1e-5

    # Small batch (single grid step).
    x = jax.random.normal(k_x, (8, IN_FEATURES), jnp.float32)
    out = jax.block_until_ready(critic_forward(x, padded, actions, use_bf16=use_bf16))
    ref = critic_reference(x, params)
    assert out.shape == (8, actions)
    assert jnp.allclose(out, ref, atol=tol, rtol=tol), "mismatch vs pure-JAX reference"

    # Batch not a multiple of 8: exercises row padding and the multi-step parallel grid.
    x2 = jax.random.normal(k_x2, (13, IN_FEATURES), jnp.float32)
    out2 = jax.block_until_ready(critic_forward(x2, padded, actions, use_bf16=use_bf16))
    ref2 = critic_reference(x2, params)
    assert out2.shape == (13, actions)
    assert jnp.allclose(out2, ref2, atol=tol, rtol=tol), "mismatch vs pure-JAX reference"

    print("KERNEL_OK")
</pallas_src>

<mosaic_0001>
module attributes {stable_mosaic.version = 11 : i64} {
  func.func @critic_mlp_kernel(%arg0: i32, %arg1: memref<8x2xf32, #tpu.memory_space<vmem>>, %arg2: memref<2x128xf32, #tpu.memory_space<vmem>>, %arg3: memref<1x128xf32, #tpu.memory_space<vmem>>, %arg4: memref<128x128xf32, #tpu.memory_space<vmem>>, %arg5: memref<1x128xf32, #tpu.memory_space<vmem>>, %arg6: memref<128x128xf32, #tpu.memory_space<vmem>>, %arg7: memref<1x128xf32, #tpu.memory_space<vmem>>, %arg8: memref<8x4xf32, #tpu.memory_space<vmem>>) attributes {dimension_semantics = [#tpu.dimension_semantics<parallel>], iteration_bounds = array<i64: 1>, scalar_prefetch = 0 : i64, scratch_operands = 0 : i64, tpu.core_type = #tpu.core_type<tc>, window_params = [{transform_indices = @transform_0, window_bounds = array<i64: 8, 2>}, {pipeline_mode = #tpu.pipeline_mode<synchronous>, transform_indices = @transform_1, window_bounds = array<i64: 2, 128>}, {pipeline_mode = #tpu.pipeline_mode<synchronous>, transform_indices = @transform_2, window_bounds = array<i64: 1, 128>}, {pipeline_mode = #tpu.pipeline_mode<synchronous>, transform_indices = @transform_3, window_bounds = array<i64: 128, 128>}, {pipeline_mode = #tpu.pipeline_mode<synchronous>, transform_indices = @transform_4, window_bounds = array<i64: 1, 128>}, {pipeline_mode = #tpu.pipeline_mode<synchronous>, transform_indices = @transform_5, window_bounds = array<i64: 128, 128>}, {pipeline_mode = #tpu.pipeline_mode<synchronous>, transform_indices = @transform_6, window_bounds = array<i64: 1, 128>}, {transform_indices = @transform_7, window_bounds = array<i64: 8, 4>}]} {
    %c0 = arith.constant 0 : index
    %c0_0 = arith.constant 0 : index
    %0 = vector.load %arg1[%c0, %c0_0] : memref<8x2xf32, #tpu.memory_space<vmem>>, vector<8x2xf32>
    %c0_1 = arith.constant 0 : index
    %c0_2 = arith.constant 0 : index
    %1 = vector.load %arg2[%c0_1, %c0_2] : memref<2x128xf32, #tpu.memory_space<vmem>>, vector<2x128xf32>
    %2 = vector.extract_strided_slice %0 {offsets = [0, 0], sizes = [8, 1], strides = [1, 1]} : vector<8x2xf32> to vector<8x1xf32>
    %3 = vector.extract_strided_slice %1 {offsets = [0, 0], sizes = [1, 128], strides = [1, 1]} : vector<2x128xf32> to vector<1x128xf32>
    %4 = vector.broadcast %2 : vector<8x1xf32> to vector<8x128xf32>
    %5 = vector.broadcast %3 : vector<1x128xf32> to vector<8x128xf32>
    %6 = arith.mulf %4, %5 : vector<8x128xf32>
    %7 = vector.extract_strided_slice %0 {offsets = [0, 1], sizes = [8, 1], strides = [1, 1]} : vector<8x2xf32> to vector<8x1xf32>
    %8 = vector.extract_strided_slice %1 {offsets = [1, 0], sizes = [1, 128], strides = [1, 1]} : vector<2x128xf32> to vector<1x128xf32>
    %9 = vector.broadcast %7 : vector<8x1xf32> to vector<8x128xf32>
    %10 = vector.broadcast %8 : vector<1x128xf32> to vector<8x128xf32>
    %11 = arith.mulf %9, %10 : vector<8x128xf32>
    %12 = arith.addf %6, %11 : vector<8x128xf32>
    %c0_3 = arith.constant 0 : index
    %c0_4 = arith.constant 0 : index
    %13 = vector.load %arg3[%c0_3, %c0_4] : memref<1x128xf32, #tpu.memory_space<vmem>>, vector<1x128xf32>
    %14 = vector.broadcast %13 : vector<1x128xf32> to vector<8x128xf32>
    %15 = arith.addf %12, %14 : vector<8x128xf32>
    %16 = math.tanh %15 : vector<8x128xf32>
    %c0_5 = arith.constant 0 : index
    %c0_6 = arith.constant 0 : index
    %17 = vector.load %arg4[%c0_5, %c0_6] : memref<128x128xf32, #tpu.memory_space<vmem>>, vector<128x128xf32>
    %cst = arith.constant dense<0.000000e+00> : vector<8x128xf32>
    %18 = tpu.matmul %16, %17, %cst {dimension_numbers = #tpu.dot_dimension_numbers<[1], [0], [0], [1], [0, 0, 1, 1], [], []>} : vector<8x128xf32>, vector<128x128xf32>, vector<8x128xf32> -> vector<8x128xf32>
    %c0_7 = arith.constant 0 : index
    %c0_8 = arith.constant 0 : index
    %19 = vector.load %arg5[%c0_7, %c0_8] : memref<1x128xf32, #tpu.memory_space<vmem>>, vector<1x128xf32>
    %20 = vector.broadcast %19 : vector<1x128xf32> to vector<8x128xf32>
    %21 = arith.addf %18, %20 : vector<8x128xf32>
    %22 = math.tanh %21 : vector<8x128xf32>
    %c0_9 = arith.constant 0 : index
    %c0_10 = arith.constant 0 : index
    %23 = vector.load %arg6[%c0_9, %c0_10] : memref<128x128xf32, #tpu.memory_space<vmem>>, vector<128x128xf32>
    %cst_11 = arith.constant dense<0.000000e+00> : vector<8x128xf32>
    %24 = tpu.matmul %22, %23, %cst_11 {dimension_numbers = #tpu.dot_dimension_numbers<[1], [0], [0], [1], [0, 0, 1, 1], [], []>} : vector<8x128xf32>, vector<128x128xf32>, vector<8x128xf32> -> vector<8x128xf32>
    %c0_12 = arith.constant 0 : index
    %c0_13 = arith.constant 0 : index
    %25 = vector.load %arg7[%c0_12, %c0_13] : memref<1x128xf32, #tpu.memory_space<vmem>>, vector<1x128xf32>
    %26 = vector.broadcast %25 : vector<1x128xf32> to vector<8x128xf32>
    %27 = arith.addf %24, %26 : vector<8x128xf32>
    %28 = vector.extract_strided_slice %27 {offsets = [0, 0], sizes = [8, 4], strides = [1, 1]} : vector<8x128xf32> to vector<8x4xf32>
    %c0_14 = arith.constant 0 : index
    %c0_15 = arith.constant 0 : index
    %29 = vector.load %arg8[%c0_14, %c0_15] : memref<8x4xf32, #tpu.memory_space<vmem>>, vector<8x4xf32>
    tpu.vector_store %arg8[%c0_14, %c0_15], %28 {strides = array<i32>} : memref<8x4xf32, #tpu.memory_space<vmem>>, vector<8x4xf32>,
    return
  }
  func.func @transform_0(%arg0: i32) -> (i32, i32) {
    %c0_i32 = arith.constant 0 : i32
    %c0_i32_0 = arith.constant 0 : i32
    return %arg0, %c0_i32 : i32, i32
  }
  func.func @transform_1(%arg0: i32) -> (i32, i32) {
    %c0_i32 = arith.constant 0 : i32
    %c0_i32_0 = arith.constant 0 : i32
    %c0_i32_1 = arith.constant 0 : i32
    return %c0_i32, %c0_i32_0 : i32, i32
  }
  func.func @transform_2(%arg0: i32) -> (i32, i32) {
    %c0_i32 = arith.constant 0 : i32
    %c0_i32_0 = arith.constant 0 : i32
    %c0_i32_1 = arith.constant 0 : i32
    return %c0_i32, %c0_i32_0 : i32, i32
  }
  func.func @transform_3(%arg0: i32) -> (i32, i32) {
    %c0_i32 = arith.constant 0 : i32
    %c0_i32_0 = arith.constant 0 : i32
    %c0_i32_1 = arith.constant 0 : i32
    return %c0_i32, %c0_i32_0 : i32, i32
  }
  func.func @transform_4(%arg0: i32) -> (i32, i32) {
    %c0_i32 = arith.constant 0 : i32
    %c0_i32_0 = arith.constant 0 : i32
    %c0_i32_1 = arith.constant 0 : i32
    return %c0_i32, %c0_i32_0 : i32, i32
  }
  func.func @transform_5(%arg0: i32) -> (i32, i32) {
    %c0_i32 = arith.constant 0 : i32
    %c0_i32_0 = arith.constant 0 : i32
    %c0_i32_1 = arith.constant 0 : i32
    return %c0_i32, %c0_i32_0 : i32, i32
  }
  func.func @transform_6(%arg0: i32) -> (i32, i32) {
    %c0_i32 = arith.constant 0 : i32
    %c0_i32_0 = arith.constant 0 : i32
    %c0_i32_1 = arith.constant 0 : i32
    return %c0_i32, %c0_i32_0 : i32, i32
  }
  func.func @transform_7(%arg0: i32) -> (i32, i32) {
    %c0_i32 = arith.constant 0 : i32
    %c0_i32_0 = arith.constant 0 : i32
    return %arg0, %c0_i32 : i32, i32
  }
}

</mosaic_0001>

<llo_original>
// kernel: critic_forward.1
$region0: #{critic_forward.1}
  #allocation0 [shape = 'u32[]', space=smem, size = 0x4, offset = 0x4, fixed_abs, tag = 'smem constant byte address 0x4 - core index']
  #allocation1 [shape = 'u32[72,128]{1,0:T(1,128)}', space=vmem, size = 0x9000, scoped, tag = 'internal scratch']
  %s0 = inlined_call_operand.vmem [shape: f32[8,2], index: 0, kind: input, shape index: {}]
  %s1 = inlined_call_operand.vmem [shape: f32[2,128], index: 1, kind: input, shape index: {}]
  %s2 = inlined_call_operand.vmem [shape: f32[1,128], index: 2, kind: input, shape index: {}]
  %s3 = inlined_call_operand.hbm [shape: f32[128,128], index: 3, kind: input, shape index: {}]
  %s4 = inlined_call_operand.vmem [shape: f32[1,128], index: 4, kind: input, shape index: {}]
  %s5 = inlined_call_operand.hbm [shape: f32[128,128], index: 5, kind: input, shape index: {}]
  %s6 = inlined_call_operand.vmem [shape: f32[1,128], index: 6, kind: input, shape index: {}]
  %s7 = inlined_call_operand.vmem [shape: f32[8,4], index: 7, kind: output, shape index: {}]
  %s8 = sld [smem:[#allocation0]]
  $region46: #{critic_forward.1} parent=0
    _
  %s10 = ssub.s32 1, %s8
  %s11 = scalar_select 0, %s10, %s8
  $region1: #{critic_forward.1} parent=0
    #allocation2 [shape = 'u8[65536]{0}', space=vmem, size = 0x10000, scoped, tag = 'input window, operand 3, single buffered']
    #allocation3 [shape = 's32[1]{0}', space=sflag, size = 0x4, scoped, tag = 'scoped memory for critic_forward.1']
    #allocation4 [shape = 'u8[65536]{0}', space=vmem, size = 0x10000, scoped, tag = 'input window, operand 5, single buffered']
    #allocation5 [shape = 's32[1]{0}', space=sflag, size = 0x4, scoped, tag = 'scoped memory for critic_forward.1']
    %12 = vsyncpa [#allocation3], 0
    %13 = vsyncpa [#allocation5], 0
    // Predicated region
    $region2: #{critic_forward.1} parent=1 // pred_check
      _
    $region3: #{critic_forward.1} parent=1 // pred_check_branch
      %15 = sbr.rel (0) target = $region5
    $region4: #{critic_forward.1} parent=1 // pred_region
      _
    $region5: #{critic_forward.1} parent=1 // pred_fallthru
      _
    // Predicated region
    $region6: #{critic_forward.1} parent=1 // pred_check
      _
    $region7: #{critic_forward.1} parent=1 // pred_check_branch
      %17 = sbr.rel (0) target = $region9
    $region8: #{critic_forward.1} parent=1 // pred_region
      _
    $region9: #{critic_forward.1} parent=1 // pred_fallthru
      _
    // Predicated region
    $region10: #{critic_forward.1} parent=1 // pred_check
      _
    $region11: #{critic_forward.1} parent=1 // pred_check_branch
      %19 = sbr.rel (0) target = $region13
    $region12: #{critic_forward.1} parent=1 // pred_region
      _
    $region13: #{critic_forward.1} parent=1 // pred_fallthru
      _
    // Predicated region
    $region14: #{critic_forward.1} parent=1 // pred_check
      _
    $region15: #{critic_forward.1} parent=1 // pred_check_branch
      %21 = sbr.rel (0) target = $region17
    $region16: #{critic_forward.1} parent=1 // pred_region
      %23 = vsyncadd [#allocation3], 0
      %s24 = sshll.u32 %s3, 4
      %s25 = int_to_ptr.hbm [resolvable:$true] %s24
      %s26 = sshll.u32 [#allocation2], 4
      %s27 = int_to_ptr.vmem [resolvable:$true] %s26
      %32 = dma.hbm_to_vmem [thread:$0]  %s25, 2048, %s27, [#allocation3], 128, 128, 8
    $region17: #{critic_forward.1} parent=1 // pred_fallthru
      _
    // Predicated region
    $region18: #{critic_forward.1} parent=1 // pred_check
      _
    $region19: #{critic_forward.1} parent=1 // pred_check_branch
      %34 = sbr.rel (0) target = $region21
    $region20: #{critic_forward.1} parent=1 // pred_region
      _
    $region21: #{critic_forward.1} parent=1 // pred_fallthru
      _
    // Predicated region
    $region22: #{critic_forward.1} parent=1 // pred_check
      _
    $region23: #{critic_forward.1} parent=1 // pred_check_branch
      %36 = sbr.rel (0) target = $region25
    $region24: #{critic_forward.1} parent=1 // pred_region
      %38 = vsyncadd [#allocation5], 0
      %s39 = sshll.u32 %s5, 4
      %s40 = int_to_ptr.hbm [resolvable:$true] %s39
      %s41 = sshll.u32 [#allocation4], 4
      %s42 = int_to_ptr.vmem [resolvable:$true] %s41
      %47 = dma.hbm_to_vmem [thread:$0]  %s40, 2048, %s42, [#allocation5], 128, 128, 8
    $region25: #{critic_forward.1} parent=1 // pred_fallthru
      _
    // Predicated region
    $region26: #{critic_forward.1} parent=1 // pred_check
      _
    $region27: #{critic_forward.1} parent=1 // pred_check_branch
      %49 = sbr.rel (0) target = $region29
    $region28: #{critic_forward.1} parent=1 // pred_region
      _
    $region29: #{critic_forward.1} parent=1 // pred_fallthru
      _
    // Predicated region
    $region30: #{critic_forward.1} parent=1 // pred_check
      _
    $region31: #{critic_forward.1} parent=1 // pred_check_branch
      %51 = sbr.rel (0) target = $region33
    $region32: #{critic_forward.1} parent=1 // pred_region
      %53 = dma.done [#allocation3], 2048
    $region33: #{critic_forward.1} parent=1 // pred_fallthru
      _
    // Predicated region
    $region34: #{critic_forward.1} parent=1 // pred_check
      _
    $region35: #{critic_forward.1} parent=1 // pred_check_branch
      %55 = sbr.rel (0) target = $region37
    $region36: #{critic_forward.1} parent=1 // pred_region
      %57 = dma.done [#allocation5], 2048
    $region37: #{critic_forward.1} parent=1 // pred_fallthru
      _
    %v58 = vld [vmem:[%s0] sm:$0xff]
    %v59 = vld [vmem:[%s1] sm:$0x3]
    %61 = vset.pattern.permute.xlu0 0
    %62 = vperm.xlu0 %61, %v58
    %v63 = vpop.permute.xlu0 %62
    %v65 = vperm.slane %v59, 0
    %v66 = vmul.f32 %v63, %v65
    %67 = vset.pattern.permute.xlu0 1
    %68 = vperm.xlu0 %67, %v58
    %v69 = vpop.permute.xlu0 %68
    %v71 = vperm.slane %v59, 1
    %v72 = vmul.f32 %v69, %v71
    %v73 = vadd.f32 %v66, %v72
    %v74 = vld [vmem:[%s2] sm:$0x1]
    %v76 = vperm.slane %v74, 0
    %v78 = vadd.f32 %v73, %v76
    %v79 = vtanh.pop %v78
    %v80 = vld [vmem:[#allocation2] sm:$0xff]
    %v81 = vld [vmem:[#allocation2 + $0x8] sm:$0xff]
    %v82 = vld [vmem:[#allocation2 + $0x10] sm:$0xff]
    %v83 = vld [vmem:[#allocation2 + $0x18] sm:$0xff]
    %v84 = vld [vmem:[#allocation2 + $0x20] sm:$0xff]
    %v85 = vld [vmem:[#allocation2 + $0x28] sm:$0xff]
    %v86 = vld [vmem:[#allocation2 + $0x30] sm:$0xff]
    %v87 = vld [vmem:[#allocation2 + $0x38] sm:$0xff]
    %v88 = vld [vmem:[#allocation2 + $0x40] sm:$0xff]
    %v89 = vld [vmem:[#allocation2 + $0x48] sm:$0xff]
    %v90 = vld [vmem:[#allocation2 + $0x50] sm:$0xff]
    %v91 = vld [vmem:[#allocation2 + $0x58] sm:$0xff]
    %v92 = vld [vmem:[#allocation2 + $0x60] sm:$0xff]
    %v93 = vld [vmem:[#allocation2 + $0x68] sm:$0xff]
    %v94 = vld [vmem:[#allocation2 + $0x70] sm:$0xff]
    %v95 = vld [vmem:[#allocation2 + $0x78] sm:$0xff]
    %v96 = vld [vmem:[%s4] sm:$0x1]
    %v98 = vperm.slane %v96, 0
    %100 = vmatpush.msra.mxu0 %v95
    %101 = vmatpush.msra.mxu0 %v94
    %102 = vmatpush.msra.mxu0 %v93
    %103 = vmatpush.msra.mxu0 %v92
    %104 = vmatpush.msra.mxu0 %v91
    %105 = vmatpush.msra.mxu0 %v90
    %106 = vmatpush.msra.mxu0 %v89
    %107 = vmatpush.msra.mxu0 %v88
    %108 = vmatpush.msra.mxu0 %v87
    %109 = vmatpush.msra.mxu0 %v86
    %110 = vmatpush.msra.mxu0 %v85
    %111 = vmatpush.msra.mxu0 %v84
    %112 = vmatpush.msra.mxu0 %v83
    %113 = vmatpush.msra.mxu0 %v82
    %114 = vmatpush.msra.mxu0 %v81
    %115 = vmatpush.msra.mxu0 %v80
    %116 = vmatmul.f32.gmra.mxu0 %v79
    %v117 = vpop.f32.mrf.mxu0
    %v118 = vadd.f32 %v98, %v117
    %119 = vdwg.mxu0
    %v120 = vtanh.pop %v118
    %v121 = vld [vmem:[#allocation4] sm:$0xff]
    %v122 = vld [vmem:[#allocation4 + $0x8] sm:$0xff]
    %v123 = vld [vmem:[#allocation4 + $0x10] sm:$0xff]
    %v124 = vld [vmem:[#allocation4 + $0x18] sm:$0xff]
    %v125 = vld [vmem:[#allocation4 + $0x20] sm:$0xff]
    %v126 = vld [vmem:[#allocation4 + $0x28] sm:$0xff]
    %v127 = vld [vmem:[#allocation4 + $0x30] sm:$0xff]
    %v128 = vld [vmem:[#allocation4 + $0x38] sm:$0xff]
    %v129 = vld [vmem:[#allocation4 + $0x40] sm:$0xff]
    %v130 = vld [vmem:[#allocation4 + $0x48] sm:$0xff]
    %v131 = vld [vmem:[#allocation4 + $0x50] sm:$0xff]
    %v132 = vld [vmem:[#allocation4 + $0x58] sm:$0xff]
    %v133 = vld [vmem:[#allocation4 + $0x60] sm:$0xff]
    %v134 = vld [vmem:[#allocation4 + $0x68] sm:$0xff]
    %v135 = vld [vmem:[#allocation4 + $0x70] sm:$0xff]
    %v136 = vld [vmem:[#allocation4 + $0x78] sm:$0xff]
    %v137 = vld [vmem:[%s6] sm:$0x1]
    %v139 = vperm.slane %v137, 0
    %141 = vmatpush.msra.mxu0 %v136
    %142 = vmatpush.msra.mxu0 %v135
    %143 = vmatpush.msra.mxu0 %v134
    %144 = vmatpush.msra.mxu0 %v133
    %145 = vmatpush.msra.mxu0 %v132
    %146 = vmatpush.msra.mxu0 %v131
    %147 = vmatpush.msra.mxu0 %v130
    %148 = vmatpush.msra.mxu0 %v129
    %149 = vmatpush.msra.mxu0 %v128
    %150 = vmatpush.msra.mxu0 %v127
    %151 = vmatpush.msra.mxu0 %v126
    %152 = vmatpush.msra.mxu0 %v125
    %153 = vmatpush.msra.mxu0 %v124
    %154 = vmatpush.msra.mxu0 %v123
    %155 = vmatpush.msra.mxu0 %v122
    %156 = vmatpush.msra.mxu0 %v121
    %157 = vmatmul.f32.gmra.mxu0 %v120
    %v158 = vpop.f32.mrf.mxu0
    %v159 = vadd.f32 %v139, %v158
    %160 = vdwg.mxu0
    %vm161 = vcmask 31744
    %162 = vst.msk [vmem:[%s7] sm:$0xff] %vm161, %v159
    // Predicated region
    $region38: #{critic_forward.1} parent=1 // pred_check
      _
    $region39: #{critic_forward.1} parent=1 // pred_check_branch
      %164 = sbr.rel (0) target = $region41
    $region40: #{critic_forward.1} parent=1 // pred_region
      _
    $region41: #{critic_forward.1} parent=1 // pred_fallthru
      _
    // Predicated region
    $region42: #{critic_forward.1} parent=1 // pred_check
      _
    $region43: #{critic_forward.1} parent=1 // pred_check_branch
      %166 = sbr.rel (0) target = $region45
    $region44: #{critic_forward.1} parent=1 // pred_region
      _
    $region45: #{critic_forward.1} parent=1 // pred_fallthru
      _
    %167 = vsyncpa [#allocation3], 1
    %168 = vsyncpa [#allocation5], 1

</llo_original>
